<compile_context>
chip_gen: v5e
topology: v5e:2x2
jax: 0.10.0
libtpu: 0.0.40
codegen_flags: <defaults>
</compile_context>

<pallas_src>
import jax
import jax.numpy as jnp
from jax.experimental import pallas as pl
from jax.experimental.pallas import tpu as pltpu


_LANE = 128
_TARGET_COLS = 1024                  # lane-dense slab width (multiple of 128, >= 512)
_MAX_BLOCK_BYTES = 4 * 1024 * 1024   # per-buffer tile ceiling: 4 MiB * (2 in + 2 out
                                     # double-buffered) = 16 MiB, safe under v7x's
                                     # 32 MiB scoped VMEM (and v5e's 16 MiB default).


def copy_kernel(x_ref, o_ref):
    # Hot path of DummyNetwork.forward: identity -> whole-block VMEM copy.
    o_ref[...] = x_ref[...]


def dummy_network_forward(x):
    """Pallas implementation of DummyNetwork.forward (identity).

    Semantically this is just `return x`; the kernel is a lane-dense,
    VMEM-budget-tiled HBM copy whose output aliases the input buffer.
    """
    orig_shape = x.shape
    orig_dtype = x.dtype
    total = x.size

    # --- flatten to a lane-dense 2D slab -------------------------------------
    cols = _TARGET_COLS if total >= _TARGET_COLS else _LANE
    padded_total = -(-total // cols) * cols
    flat = x.reshape(-1)
    if padded_total != total:
        flat = jnp.pad(flat, (0, padded_total - total))
    rows = padded_total // cols
    slab = flat.reshape(rows, cols)

    # --- pick the largest row-block that fits the VMEM budget ----------------
    itemsize = jnp.dtype(orig_dtype).itemsize
    bytes_per_row = cols * itemsize
    max_block_rows = max(8, (_MAX_BLOCK_BYTES // bytes_per_row) // 8 * 8)

    if rows <= max_block_rows:
        # Single block == full array: one grid step, no (8,128) constraint issues.
        block_rows = rows
        grid_rows = rows
    else:
        # Tile rows; block_rows is a multiple of 8 and cols a multiple of 128.
        block_rows = max_block_rows
        grid_rows = -(-rows // block_rows) * block_rows
        if grid_rows != rows:
            slab = jnp.pad(slab, ((0, grid_rows - rows), (0, 0)))

    grid = (grid_rows // block_rows,)

    out = pl.pallas_call(
        copy_kernel,
        out_shape=jax.ShapeDtypeStruct((grid_rows, cols), orig_dtype),
        grid_spec=pl.GridSpec(
            grid=grid,
            in_specs=[pl.BlockSpec((block_rows, cols), lambda i: (i, 0))],
            out_specs=pl.BlockSpec((block_rows, cols), lambda i: (i, 0)),
        ),
        input_output_aliases={0: 0},  # identity: reuse the input HBM buffer
        compiler_params=pltpu.CompilerParams(
            dimension_semantics=("parallel",),  # shards across TCs on v7x for big inputs
        ),
    )(slab)

    return out.reshape(-1)[:total].reshape(orig_shape)


if __name__ == "__main__":
    key = jax.random.PRNGKey(0)
    # Small NCHW input consistent with the module: batch=2, channels=4, 16x16.
    x = jax.random.normal(key, (2, 4, 16, 16), dtype=jnp.float32)

    y = dummy_network_forward(x)
    y = jax.block_until_ready(y)

    assert y.shape == x.shape
    assert y.dtype == x.dtype
    assert bool(jnp.allclose(y, x)), "identity kernel mismatch"

    print("KERNEL_OK")
</pallas_src>

<mosaic_0001>
module attributes {stable_mosaic.version = 11 : i64} {
  func.func @copy_kernel(%arg0: i32, %arg1: memref<2x1024xf32, #tpu.memory_space<vmem>>, %arg2: memref<2x1024xf32, #tpu.memory_space<vmem>>) attributes {dimension_semantics = [#tpu.dimension_semantics<parallel>], iteration_bounds = array<i64: 1>, scalar_prefetch = 0 : i64, scratch_operands = 0 : i64, tpu.core_type = #tpu.core_type<tc>, window_params = [{transform_indices = @transform_0, window_bounds = array<i64: 2, 1024>}, {transform_indices = @transform_1, window_bounds = array<i64: 2, 1024>}]} {
    %c0 = arith.constant 0 : index
    %c0_0 = arith.constant 0 : index
    %0 = vector.load %arg1[%c0, %c0_0] : memref<2x1024xf32, #tpu.memory_space<vmem>>, vector<2x1024xf32>
    %c0_1 = arith.constant 0 : index
    %c0_2 = arith.constant 0 : index
    %1 = vector.load %arg2[%c0_1, %c0_2] : memref<2x1024xf32, #tpu.memory_space<vmem>>, vector<2x1024xf32>
    tpu.vector_store %arg2[%c0_1, %c0_2], %0 {strides = array<i32>} : memref<2x1024xf32, #tpu.memory_space<vmem>>, vector<2x1024xf32>,
    return
  }
  func.func @transform_0(%arg0: i32) -> (i32, i32) {
    %c0_i32 = arith.constant 0 : i32
    %c0_i32_0 = arith.constant 0 : i32
    return %arg0, %c0_i32 : i32, i32
  }
  func.func @transform_1(%arg0: i32) -> (i32, i32) {
    %c0_i32 = arith.constant 0 : i32
    %c0_i32_0 = arith.constant 0 : i32
    return %arg0, %c0_i32 : i32, i32
  }
}

</mosaic_0001>

<llo_original>
// kernel: tpu_custom_call.1
$region0: #{tpu_custom_call.1}
  #allocation0 [shape = 'u32[]', space=smem, size = 0x4, offset = 0x4, fixed_abs, tag = 'smem constant byte address 0x4 - core index']
  #allocation1 [shape = 'u32[72,128]{1,0:T(1,128)}', space=vmem, size = 0x9000, scoped, tag = 'internal scratch']
  %s0 = inlined_call_operand.hbm [shape: f32[2,1024], index: 0, kind: input, shape index: {}, may-alias: {0,1}]
  %s1 = inlined_call_operand.hbm [shape: f32[2,1024], index: 1, kind: output, shape index: {}, may-alias: {0,1}]
  %s2 = sld [smem:[#allocation0]]
  $region18: #{tpu_custom_call.1} parent=0
    _
  %s4 = ssub.s32 1, %s2
  %s5 = scalar_select 0, %s4, %s2
  $region1: #{tpu_custom_call.1} parent=0
    #allocation2 [shape = 'u8[8192]{0}', space=vmem, size = 0x2000, scoped, tag = 'input window, operand 0, single buffered']
    #allocation3 [shape = 's32[1]{0}', space=sflag, size = 0x4, scoped, tag = 'scoped memory for tpu_custom_call.1']
    #allocation4 [shape = 's32[1]{0}', space=sflag, size = 0x4, scoped, tag = 'scoped memory for tpu_custom_call.1']
    #allocation5 [shape = 'u8[8192]{0}', space=vmem, size = 0x2000, scoped, tag = 'output window, operand 0, single buffered']
    %6 = vsyncpa [#allocation3], 0
    %7 = vsyncpa [#allocation4], 0
    // Predicated region
    $region2: #{tpu_custom_call.1} parent=1 // pred_check
      _
    $region3: #{tpu_custom_call.1} parent=1 // pred_check_branch
      %9 = sbr.rel (0) target = $region5
    $region4: #{tpu_custom_call.1} parent=1 // pred_region
      %11 = vsyncadd [#allocation3], 0
      %s13 = sshll.u32 %s0, 4
      %s14 = int_to_ptr.hbm [resolvable:$true] %s13
      %s15 = sshll.u32 [#allocation2], 4
      %s16 = int_to_ptr.vmem [resolvable:$true] %s15
      %18 = dma.hbm_to_vmem [thread:$0]  %s14, 256, %s16, [#allocation3]
    $region5: #{tpu_custom_call.1} parent=1 // pred_fallthru
      _
    // Predicated region
    $region6: #{tpu_custom_call.1} parent=1 // pred_check
      _
    $region7: #{tpu_custom_call.1} parent=1 // pred_check_branch
      %20 = sbr.rel (0) target = $region9
    $region8: #{tpu_custom_call.1} parent=1 // pred_region
      %22 = dma.done [#allocation3], 256
    $region9: #{tpu_custom_call.1} parent=1 // pred_fallthru
      _
    %v23 = vld [vmem:[#allocation2] sm:$0xff]
    %v24 = vld [vmem:[#allocation2 + $0x8] sm:$0xff]
    %25 = vst [vmem:[#allocation5] sm:$0xff] %v23
    %26 = vst [vmem:[#allocation5 + $0x8] sm:$0xff] %v24
    // Predicated region
    $region10: #{tpu_custom_call.1} parent=1 // pred_check
      _
    $region11: #{tpu_custom_call.1} parent=1 // pred_check_branch
      %28 = sbr.rel (0) target = $region13
    $region12: #{tpu_custom_call.1} parent=1 // pred_region
      %30 = vsyncadd [#allocation4], 0
      %s32 = sshll.u32 [#allocation5], 4
      %s33 = int_to_ptr.vmem [resolvable:$true] %s32
      %s34 = sshll.u32 %s1, 4
      %s35 = int_to_ptr.hbm [resolvable:$true] %s34
      %37 = dma.vmem_to_hbm [thread:$0]  %s33, 256, %s35, [#allocation4]
    $region13: #{tpu_custom_call.1} parent=1 // pred_fallthru
      _
    // Predicated region
    $region14: #{tpu_custom_call.1} parent=1 // pred_check
      _
    $region15: #{tpu_custom_call.1} parent=1 // pred_check_branch
      %39 = sbr.rel (0) target = $region17
    $region16: #{tpu_custom_call.1} parent=1 // pred_region
      %41 = dma.done [#allocation4], 256
    $region17: #{tpu_custom_call.1} parent=1 // pred_fallthru
      _
    %42 = vsyncpa [#allocation3], 1
    %43 = vsyncpa [#allocation4], 1

</llo_original>
